<compile_context>
chip_gen: v5e
topology: v5e:2x2
jax: 0.10.0
libtpu: 0.0.40
codegen_flags: <defaults>
</compile_context>

<pallas_src>
import jax
import jax.numpy as jnp
from jax.experimental import pallas as pl
from jax.experimental.pallas import tpu as pltpu


def graph_encoder_attention_kernel(ht_ref, rel_ref, wht_ref, wr_ref, o_ref):
    # ht_ref : (TB, N, 2E)   concat(head, tail) along features
    # rel_ref: (TB, N, R)
    # wht_ref: (2E, G)       [Wh; Wt] stacked along the input dim
    # wr_ref : (R, G)
    # o_ref  : (TB, 2E)
    TB, N, E2 = ht_ref.shape
    R = rel_ref.shape[-1]
    G = wht_ref.shape[-1]

    ht = ht_ref[...].astype(jnp.float32)                       # (TB, N, 2E)
    r = rel_ref[...].astype(jnp.float32)                       # (TB, N, R)

    # Fused head/tail projection and rel projection: one large MXU matmul each,
    # batch folded into the M dimension (weights shared across the batch).
    hh_th = jnp.dot(ht.reshape(TB * N, E2), wht_ref[...],
                    preferred_element_type=jnp.float32)        # (TB*N, G) == hh + th
    rh = jnp.dot(r.reshape(TB * N, R), wr_ref[...],
                 preferred_element_type=jnp.float32)           # (TB*N, G)

    hh_th = hh_th.reshape(TB, N, G)
    rh = rh.reshape(TB, N, G)

    # Attention logits over the N subgraph entries (lane reduce over G).
    beta = jnp.sum(rh * jnp.tanh(hh_th), axis=-1)              # (TB, N)

    # softmax over N (dim=1 in the torch code), max-subtracted.
    m = jnp.max(beta, axis=-1, keepdims=True)                  # (TB, 1)
    e = jnp.exp(beta - m)                                      # (TB, N)
    denom = jnp.sum(e, axis=-1, keepdims=True)                 # (TB, 1)
    alpha = e * pl.reciprocal(denom, approx=True)              # (TB, N)

    # g[b] = sum_n alpha[b, n] * concat(head, tail)[b, n, :]
    # VPU broadcast-multiply + sublane reduce (no transpose, no extra concat).
    g = jnp.sum(alpha[:, :, None] * ht, axis=1)                # (TB, 2E)

    o_ref[...] = g.astype(o_ref.dtype)


def _pick_tb(batch):
    # Aim for >= 2 grid steps (v7x has 2 TensorCores), TB a multiple of 8,
    # capped at 256 rows per step (well inside the 64 MiB v7x VMEM budget).
    half = pl.cdiv(batch, 2)
    tb = ((half + 7) // 8) * 8
    return max(8, min(256, tb))


def graph_encoder_attention(head, tail, rel, wh, wt, wr, *, tb=None):
    B, N, E = head.shape
    R = rel.shape[-1]
    G = wh.shape[1]

    # Done once, wrapper-side (plain XLA ops, not per grid step):
    ht = jnp.concatenate([head, tail], axis=-1)                # (B, N, 2E)
    wht = jnp.concatenate([wh, wt], axis=0)                    # (2E, G)

    if tb is None:
        tb = _pick_tb(B)
    tb = ((max(8, min(tb, 256)) + 7) // 8) * 8

    nb = pl.cdiv(B, tb)
    b_pad = nb * tb
    if b_pad != B:
        # Zero-padded batch rows give beta == 0 -> uniform softmax -> finite junk
        # that is sliced off below; softmax over N is per-row so real rows are
        # unaffected.
        pad = b_pad - B
        ht = jnp.pad(ht, ((0, pad), (0, 0), (0, 0)))
        rel = jnp.pad(rel, ((0, pad), (0, 0), (0, 0)))

    out = pl.pallas_call(
        graph_encoder_attention_kernel,
        out_shape=jax.ShapeDtypeStruct((b_pad, 2 * E), head.dtype),
        grid_spec=pltpu.PrefetchScalarGridSpec(
            num_scalar_prefetch=0,
            grid=(nb,),
            in_specs=[
                pl.BlockSpec((tb, N, 2 * E), lambda b: (b, 0, 0)),   # concat(head,tail)
                pl.BlockSpec((tb, N, R), lambda b: (b, 0, 0)),       # rel
                pl.BlockSpec((2 * E, G), lambda b: (0, 0)),          # [Wh; Wt]
                pl.BlockSpec((R, G), lambda b: (0, 0)),              # Wr
            ],
            out_specs=pl.BlockSpec((tb, 2 * E), lambda b: (b, 0)),
        ),
        compiler_params=pltpu.CompilerParams(
            dimension_semantics=("parallel",),
            vmem_limit_bytes=64 * 1024 * 1024,
        ),
    )(ht, rel, wht, wr)
    return out[:B]


def reference_jax(head, tail, rel, wh, wt, wr):
    hh = head @ wh
    th = tail @ wt
    rh = rel @ wr
    beta = jnp.sum(rh * jnp.tanh(hh + th), axis=2)
    alpha = jax.nn.softmax(beta, axis=1)
    g = jnp.sum(alpha[:, :, None] * jnp.concatenate([head, tail], axis=2), axis=1)
    return g


if __name__ == "__main__":
    # Small shapes consistent with the module's forward.
    B, N = 16, 8                 # batch, subgraph (neighbor) count
    E_ENT, E_REL = 32, 16        # entity / relation embedding sizes
    G = 32                       # Graph_encoder_internal_size (small for the demo)

    key = jax.random.PRNGKey(0)
    k_head, k_tail, k_rel, k_wh, k_wt, k_wr = jax.random.split(key, 6)

    head = jax.random.normal(k_head, (B, N, E_ENT), dtype=jnp.float32)
    tail = jax.random.normal(k_tail, (B, N, E_ENT), dtype=jnp.float32)
    rel = jax.random.normal(k_rel, (B, N, E_REL), dtype=jnp.float32)

    # Deterministic init matching nn.Linear(bias=False) default, stored as
    # (in_features, out_features) i.e. pre-transposed vs the torch weight.
    def linear_w(k, fan_in, fan_out):
        bound = 1.0 / (fan_in ** 0.5)
        return jax.random.uniform(k, (fan_in, fan_out), jnp.float32, -bound, bound)

    wh = linear_w(k_wh, E_ENT, G)
    wt = linear_w(k_wt, E_ENT, G)
    wr = linear_w(k_wr, E_REL, G)

    g = graph_encoder_attention(head, tail, rel, wh, wt, wr)
    g = jax.block_until_ready(g)

    g_ref = reference_jax(head, tail, rel, wh, wt, wr)
    assert g.shape == (B, 2 * E_ENT)
    # Tolerance accounts for the approximate (EUP) reciprocal in the softmax.
    assert jnp.allclose(g, g_ref, rtol=2e-3, atol=2e-3), "mismatch vs JAX reference"

    print("KERNEL_OK")
</pallas_src>

<mosaic_0001>
module attributes {stable_mosaic.version = 11 : i64} {
  func.func @graph_encoder_attention_kernel(%arg0: i32, %arg1: memref<8x8x64xf32, #tpu.memory_space<vmem>>, %arg2: memref<8x8x16xf32, #tpu.memory_space<vmem>>, %arg3: memref<64x32xf32, #tpu.memory_space<vmem>>, %arg4: memref<16x32xf32, #tpu.memory_space<vmem>>, %arg5: memref<8x64xf32, #tpu.memory_space<vmem>>) attributes {dimension_semantics = [#tpu.dimension_semantics<parallel>], iteration_bounds = array<i64: 2>, scalar_prefetch = 0 : i64, scratch_operands = 0 : i64, tpu.core_type = #tpu.core_type<tc>, window_params = [{transform_indices = @transform_0, window_bounds = array<i64: 8, 8, 64>}, {transform_indices = @transform_1, window_bounds = array<i64: 8, 8, 16>}, {pipeline_mode = #tpu.pipeline_mode<synchronous>, transform_indices = @transform_2, window_bounds = array<i64: 64, 32>}, {pipeline_mode = #tpu.pipeline_mode<synchronous>, transform_indices = @transform_3, window_bounds = array<i64: 16, 32>}, {transform_indices = @transform_4, window_bounds = array<i64: 8, 64>}]} {
    %c0 = arith.constant 0 : index
    %c0_0 = arith.constant 0 : index
    %c0_1 = arith.constant 0 : index
    %0 = vector.load %arg1[%c0, %c0_0, %c0_1] : memref<8x8x64xf32, #tpu.memory_space<vmem>>, vector<8x8x64xf32>
    %c0_2 = arith.constant 0 : index
    %c0_3 = arith.constant 0 : index
    %c0_4 = arith.constant 0 : index
    %1 = vector.load %arg2[%c0_2, %c0_3, %c0_4] : memref<8x8x16xf32, #tpu.memory_space<vmem>>, vector<8x8x16xf32>
    %2 = vector.shape_cast %0 : vector<8x8x64xf32> to vector<64x64xf32>
    %c0_5 = arith.constant 0 : index
    %c0_6 = arith.constant 0 : index
    %3 = vector.load %arg3[%c0_5, %c0_6] : memref<64x32xf32, #tpu.memory_space<vmem>>, vector<64x32xf32>
    %cst = arith.constant dense<0.000000e+00> : vector<64x32xf32>
    %4 = tpu.matmul %2, %3, %cst {dimension_numbers = #tpu.dot_dimension_numbers<[1], [0], [0], [1], [0, 0, 1, 1], [], []>} : vector<64x64xf32>, vector<64x32xf32>, vector<64x32xf32> -> vector<64x32xf32>
    %5 = vector.shape_cast %1 : vector<8x8x16xf32> to vector<64x16xf32>
    %c0_7 = arith.constant 0 : index
    %c0_8 = arith.constant 0 : index
    %6 = vector.load %arg4[%c0_7, %c0_8] : memref<16x32xf32, #tpu.memory_space<vmem>>, vector<16x32xf32>
    %cst_9 = arith.constant dense<0.000000e+00> : vector<64x32xf32>
    %7 = tpu.matmul %5, %6, %cst_9 {dimension_numbers = #tpu.dot_dimension_numbers<[1], [0], [0], [1], [0, 0, 1, 1], [], []>} : vector<64x16xf32>, vector<16x32xf32>, vector<64x32xf32> -> vector<64x32xf32>
    %8 = vector.shape_cast %4 : vector<64x32xf32> to vector<8x8x32xf32>
    %9 = vector.shape_cast %7 : vector<64x32xf32> to vector<8x8x32xf32>
    %10 = math.tanh %8 : vector<8x8x32xf32>
    %11 = arith.mulf %9, %10 : vector<8x8x32xf32>
    %cst_10 = arith.constant dense<0.000000e+00> : vector<8x8xf32>
    %12 = vector.multi_reduction <add>, %11, %cst_10 [2] : vector<8x8x32xf32> to vector<8x8xf32>
    %cst_11 = arith.constant dense<0xFF800000> : vector<8xf32>
    %13 = vector.multi_reduction <maximumf>, %12, %cst_11 [1] : vector<8x8xf32> to vector<8xf32>
    %14 = vector.shape_cast %13 : vector<8xf32> to vector<8x1xf32>
    %15 = vector.broadcast %14 : vector<8x1xf32> to vector<8x8xf32>
    %16 = arith.subf %12, %15 : vector<8x8xf32>
    %17 = math.exp %16 : vector<8x8xf32>
    %cst_12 = arith.constant dense<0.000000e+00> : vector<8xf32>
    %18 = vector.multi_reduction <add>, %17, %cst_12 [1] : vector<8x8xf32> to vector<8xf32>
    %19 = vector.shape_cast %18 : vector<8xf32> to vector<8x1xf32>
    %20 = tpu.reciprocal %19 {approx = true} : vector<8x1xf32> -> vector<8x1xf32>
    %21 = vector.broadcast %20 : vector<8x1xf32> to vector<8x8xf32>
    %22 = arith.mulf %17, %21 : vector<8x8xf32>
    %23 = vector.shape_cast %22 : vector<8x8xf32> to vector<8x8x1xf32>
    %24 = vector.broadcast %23 : vector<8x8x1xf32> to vector<8x8x64xf32>
    %25 = arith.mulf %24, %0 : vector<8x8x64xf32>
    %cst_13 = arith.constant dense<0.000000e+00> : vector<8x64xf32>
    %26 = vector.multi_reduction <add>, %25, %cst_13 [1] : vector<8x8x64xf32> to vector<8x64xf32>
    %c0_14 = arith.constant 0 : index
    %c0_15 = arith.constant 0 : index
    %27 = vector.load %arg5[%c0_14, %c0_15] : memref<8x64xf32, #tpu.memory_space<vmem>>, vector<8x64xf32>
    tpu.vector_store %arg5[%c0_14, %c0_15], %26 {strides = array<i32>} : memref<8x64xf32, #tpu.memory_space<vmem>>, vector<8x64xf32>,
    return
  }
  func.func @transform_0(%arg0: i32) -> (i32, i32, i32) {
    %c0_i32 = arith.constant 0 : i32
    %c0_i32_0 = arith.constant 0 : i32
    %c0_i32_1 = arith.constant 0 : i32
    return %arg0, %c0_i32, %c0_i32_0 : i32, i32, i32
  }
  func.func @transform_1(%arg0: i32) -> (i32, i32, i32) {
    %c0_i32 = arith.constant 0 : i32
    %c0_i32_0 = arith.constant 0 : i32
    %c0_i32_1 = arith.constant 0 : i32
    return %arg0, %c0_i32, %c0_i32_0 : i32, i32, i32
  }
  func.func @transform_2(%arg0: i32) -> (i32, i32) {
    %c0_i32 = arith.constant 0 : i32
    %c0_i32_0 = arith.constant 0 : i32
    %c0_i32_1 = arith.constant 0 : i32
    return %c0_i32, %c0_i32_0 : i32, i32
  }
  func.func @transform_3(%arg0: i32) -> (i32, i32) {
    %c0_i32 = arith.constant 0 : i32
    %c0_i32_0 = arith.constant 0 : i32
    %c0_i32_1 = arith.constant 0 : i32
    return %c0_i32, %c0_i32_0 : i32, i32
  }
  func.func @transform_4(%arg0: i32) -> (i32, i32) {
    %c0_i32 = arith.constant 0 : i32
    %c0_i32_0 = arith.constant 0 : i32
    return %arg0, %c0_i32 : i32, i32
  }
}

</mosaic_0001>

<llo_original>
// kernel: tpu_custom_call.1
$region0: #{tpu_custom_call.1}
  #allocation0 [shape = 'u32[]', space=smem, size = 0x4, offset = 0x4, fixed_abs, tag = 'smem constant byte address 0x4 - core index']
  #allocation1 [shape = 'u32[72,128]{1,0:T(1,128)}', space=vmem, size = 0x9000, scoped, tag = 'internal scratch']
  %s0 = inlined_call_operand.hbm [shape: f32[16,8,64], index: 0, kind: input, shape index: {}]
  %s1 = inlined_call_operand.hbm [shape: f32[16,8,16], index: 1, kind: input, shape index: {}]
  %s2 = inlined_call_operand.vmem [shape: f32[64,32], index: 2, kind: input, shape index: {}]
  %s3 = inlined_call_operand.vmem [shape: f32[16,32], index: 3, kind: input, shape index: {}]
  %s4 = inlined_call_operand.hbm [shape: f32[16,64], index: 4, kind: output, shape index: {}]
  %s5 = sld [smem:[#allocation0]]
  $region57: #{tpu_custom_call.1} parent=0
    _
  %s7 = ssub.s32 1, %s5
  %s8 = scalar_select 0, %s7, %s5
  $region1: #{tpu_custom_call.1} parent=0
    #allocation2 [shape = 'u8[65536]{0}', space=vmem, size = 0x10000, scoped, tag = 'input window, operand 0']
    #allocation3 [shape = 's32[2]{0}', space=sflag, size = 0x8, scoped, tag = 'scoped memory for tpu_custom_call.1']
    #allocation4 [shape = 's32[2]{0}', space=sflag, size = 0x8, scoped, tag = 'scoped memory for tpu_custom_call.1']
    #allocation5 [shape = 'u8[65536]{0}', space=vmem, size = 0x10000, scoped, tag = 'input window, operand 1']
    #allocation6 [shape = 's32[2]{0}', space=sflag, size = 0x8, scoped, tag = 'scoped memory for tpu_custom_call.1']
    #allocation7 [shape = 'u8[8192]{0}', space=vmem, size = 0x2000, scoped, tag = 'output window, operand 0']
    %9 = vsyncpa [#allocation3], 0
    %s10 = scalar_lea.sflag [#allocation3], 1
    %11 = vsyncpa %s10, 0
    %12 = vsyncpa [#allocation6], 0
    %s13 = scalar_lea.sflag [#allocation6], 1
    %14 = vsyncpa %s13, 0
    %15 = vsyncpa [#allocation4], 0
    %s16 = scalar_lea.sflag [#allocation4], 1
    %17 = vsyncpa %s16, 0
    loop: start=0, step=1, limit=4
    $region2: #{tpu_custom_call.1} parent=1 // loop_pre_header
      _
    $region3: #{tpu_custom_call.1} parent=1 // loop_header
      %s19 = sphi 0, %s23
      %p20 = scmp.ge.s32.totalorder %s19, 4
      %s29 = sphi 0, %s31
      %s32 = sphi 0, %s29
      %s33 = sphi 0, %s32
      %s49 = sphi 0, %s33
      %s55 = sphi 0, %s57
      %s58 = sphi 0, %s55
      %s59 = sphi 0, %s58
      %s75 = sphi 0, %s59
      %s79 = sphi 0, %s79
      %s81 = sphi 0, %s79
      %s82 = sphi 0, %s81
      %s96 = sphi 0, %s82
      %s100 = sphi 0, %s100
      %s102 = sphi 0, %s100
      %s103 = sphi 0, %s102
      %s117 = sphi 0, %s103
      %s123 = sphi 0, %s125
      %s126 = sphi 0, %s123
      %s127 = sphi 0, %s126
      %s143 = sphi 0, %s127
    $region4: #{tpu_custom_call.1} parent=1 // loop_header_branch
      %22 = sbr.rel (%p20) target = $region8
    $region5: #{tpu_custom_call.1} parent=1 // loop_body
      %s24 = ssub.s32 %s19, 1
      %s25 = ssub.s32 %s19, 2
      %s26 = sadd.s32 %s19, 1
      %s27 = ssub.s32 %s19, %s26
      %p28 = scmp.eq.s32.totalorder %s27, 0
      %s30 = sadd.s32 %s29, 1
      %s31 = scalar_select %p28, %s29, %s30
      %p34 = pneg %p28
      %p35 = scmp.eq.s32.totalorder %s19, 1
      %p36 = por %p34, %p35
      %p37 = scmp.ne.s32.totalorder %s29, %s32
      %p38 = scmp.eq.s32.totalorder %s19, 0
      %p39 = por %p37, %p38
      %p40 = scmp.ne.s32.totalorder %s29, %s32
      %p41 = scmp.eq.s32.totalorder %s24, 1
      %p42 = por %p40, %p41
      %p43 = scmp.ne.s32.totalorder %s32, %s33
      %p44 = scmp.eq.s32.totalorder %s24, 0
      %p45 = por %p43, %p44
      %p46 = scmp.ne.s32.totalorder %s32, %s33
      %p47 = scmp.eq.s32.totalorder %s25, 1
      %p48 = por %p46, %p47
      %p50 = scmp.ne.s32.totalorder %s33, %s49
      %p51 = scmp.eq.s32.totalorder %s25, 0
      %p52 = por %p50, %p51
      %s53 = ssub.s32 %s19, %s26
      %p54 = scmp.eq.s32.totalorder %s53, 0
      %s56 = sadd.s32 %s55, 1
      %s57 = scalar_select %p54, %s55, %s56
      %p60 = pneg %p54
      %p61 = scmp.eq.s32.totalorder %s19, 1
      %p62 = por %p60, %p61
      %p63 = scmp.ne.s32.totalorder %s55, %s58
      %p64 = scmp.eq.s32.totalorder %s19, 0
      %p65 = por %p63, %p64
      %p66 = scmp.ne.s32.totalorder %s55, %s58
      %p67 = scmp.eq.s32.totalorder %s24, 1
      %p68 = por %p66, %p67
      %p69 = scmp.ne.s32.totalorder %s58, %s59
      %p70 = scmp.eq.s32.totalorder %s24, 0
      %p71 = por %p69, %p70
      %p72 = scmp.ne.s32.totalorder %s58, %s59
      %p73 = scmp.eq.s32.totalorder %s25, 1
      %p74 = por %p72, %p73
      %p76 = scmp.ne.s32.totalorder %s59, %s75
      %p77 = scmp.eq.s32.totalorder %s25, 0
      %p78 = por %p76, %p77
      %s80 = sadd.s32 %s79, 1
      %p83 = scmp.eq.s32.totalorder %s19, 1
      %p84 = scmp.ne.s32.totalorder %s79, %s81
      %p85 = scmp.eq.s32.totalorder %s19, 0
      %p86 = por %p84, %p85
      %p87 = scmp.ne.s32.totalorder %s79, %s81
      %p88 = scmp.eq.s32.totalorder %s24, 1
      %p89 = por %p87, %p88
      %p90 = scmp.ne.s32.totalorder %s81, %s82
      %p91 = scmp.eq.s32.totalorder %s24, 0
      %p92 = por %p90, %p91
      %p93 = scmp.ne.s32.totalorder %s81, %s82
      %p94 = scmp.eq.s32.totalorder %s25, 1
      %p95 = por %p93, %p94
      %p97 = scmp.ne.s32.totalorder %s82, %s96
      %p98 = scmp.eq.s32.totalorder %s25, 0
      %p99 = por %p97, %p98
      %s101 = sadd.s32 %s100, 1
      %p104 = scmp.eq.s32.totalorder %s19, 1
      %p105 = scmp.ne.s32.totalorder %s100, %s102
      %p106 = scmp.eq.s32.totalorder %s19, 0
      %p107 = por %p105, %p106
      %p108 = scmp.ne.s32.totalorder %s100, %s102
      %p109 = scmp.eq.s32.totalorder %s24, 1
      %p110 = por %p108, %p109
      %p111 = scmp.ne.s32.totalorder %s102, %s103
      %p112 = scmp.eq.s32.totalorder %s24, 0
      %p113 = por %p111, %p112
      %p114 = scmp.ne.s32.totalorder %s102, %s103
      %p115 = scmp.eq.s32.totalorder %s25, 1
      %p116 = por %p114, %p115
      %p118 = scmp.ne.s32.totalorder %s103, %s117
      %p119 = scmp.eq.s32.totalorder %s25, 0
      %p120 = por %p118, %p119
      %s121 = ssub.s32 %s19, %s26
      %p122 = scmp.eq.s32.totalorder %s121, 0
      %s124 = sadd.s32 %s123, 1
      %s125 = scalar_select %p122, %s123, %s124
      %p128 = pneg %p122
      %p129 = scmp.eq.s32.totalorder %s19, 1
      %p130 = por %p128, %p129
      %p131 = scmp.ne.s32.totalorder %s123, %s126
      %p132 = scmp.eq.s32.totalorder %s19, 0
      %p133 = por %p131, %p132
      %p134 = scmp.ne.s32.totalorder %s123, %s126
      %p135 = scmp.eq.s32.totalorder %s24, 1
      %p136 = por %p134, %p135
      %p137 = scmp.ne.s32.totalorder %s126, %s127
      %p138 = scmp.eq.s32.totalorder %s24, 0
      %p139 = por %p137, %p138
      %p140 = scmp.ne.s32.totalorder %s126, %s127
      %p141 = scmp.eq.s32.totalorder %s25, 1
      %p142 = por %p140, %p141
      %p144 = scmp.ne.s32.totalorder %s127, %s143
      %p145 = scmp.eq.s32.totalorder %s25, 0
      %p146 = por %p144, %p145
      %p147 = scmp.le.s32.totalorder 1, %s19
      %p148 = scmp.lt.s32.totalorder %s19, 3
      %p149 = pnand %p147, %p148
      %p150 = pneg %p149
      // Predicated region
      $region9: #{tpu_custom_call.1} parent=5 // pred_check
        _
      $region10: #{tpu_custom_call.1} parent=5 // pred_check_branch
        %152 = sbr.rel (%p149) target = $region12
      $region11: #{tpu_custom_call.1} parent=5 // pred_region
        %s153 = ssub.s32 %s19, 1
        // Predicated region
        $region13: #{tpu_custom_call.1} parent=11 // pred_check
          %p154 = pneg %p92
        $region14: #{tpu_custom_call.1} parent=11 // pred_check_branch
          %156 = sbr.rel (%p154) target = $region16
        $region15: #{tpu_custom_call.1} parent=11 // pred_region
          _
        $region16: #{tpu_custom_call.1} parent=11 // pred_fallthru
          _
        // Predicated region
        $region17: #{tpu_custom_call.1} parent=11 // pred_check
          %p157 = pneg %p113
        $region18: #{tpu_custom_call.1} parent=11 // pred_check_branch
          %159 = sbr.rel (%p157) target = $region20
        $region19: #{tpu_custom_call.1} parent=11 // pred_region
          _
        $region20: #{tpu_custom_call.1} parent=11 // pred_fallthru
          _
      $region12: #{tpu_custom_call.1} parent=5 // pred_fallthru
        _
      %p160 = scmp.lt.s32.totalorder %s19, 2
      // Predicated region
      $region21: #{tpu_custom_call.1} parent=5 // pred_check
        %p161 = pneg %p160
      $region22: #{tpu_custom_call.1} parent=5 // pred_check_branch
        %163 = sbr.rel (%p161) target = $region24
      $region23: #{tpu_custom_call.1} parent=5 // pred_region
        // Predicated region
        $region25: #{tpu_custom_call.1} parent=23 // pred_check
          %p164 = pneg %p39
        $region26: #{tpu_custom_call.1} parent=23 // pred_check_branch
          %166 = sbr.rel (%p164) target = $region28
        $region27: #{tpu_custom_call.1} parent=23 // pred_region
          %s167 = sand.u32 %s29, 1
          %s168 = scalar_lea.sflag [#allocation3], %s167
          %s169 = sand.u32 %s29, 1
          %s170 = smul.addr %s169, 64
          %s171 = scalar_lea.vmem [#allocation2], %s170
          %s172 = smul.u32 8, %s19
          %174 = vsyncadd %s168, 0
          %s175 = smul.addr %s172, 8
          %s176 = scalar_lea.hbm %s0, %s175
          %s177 = sshll.u32 %s176, 4
          %s178 = int_to_ptr.hbm [resolvable:$true] %s177
          %s179 = sshll.u32 %s171, 4
          %s180 = int_to_ptr.vmem [resolvable:$true] %s179
          %185 = dma.hbm_to_vmem [thread:$0]  %s178, 1024, %s180, %s168, 128, 128, 8
        $region28: #{tpu_custom_call.1} parent=23 // pred_fallthru
          _
        // Predicated region
        $region29: #{tpu_custom_call.1} parent=23 // pred_check
          %p186 = pneg %p65
        $region30: #{tpu_custom_call.1} parent=23 // pred_check_branch
          %188 = sbr.rel (%p186) target = $region32
        $region31: #{tpu_custom_call.1} parent=23 // pred_region
          %s189 = sand.u32 %s55, 1
          %s190 = scalar_lea.sflag [#allocation6], %s189
          %s191 = sand.u32 %s55, 1
          %s192 = smul.addr %s191, 64
          %s193 = scalar_lea.vmem [#allocation5], %s192
          %s194 = smul.u32 8, %s19
          %196 = vsyncadd %s190, 0
          %s197 = smul.addr %s194, 8
          %s198 = scalar_lea.hbm %s1, %s197
          %s199 = sshll.u32 %s198, 4
          %s200 = int_to_ptr.hbm [resolvable:$true] %s199
          %s201 = sshll.u32 %s193, 4
          %s202 = int_to_ptr.vmem [resolvable:$true] %s201
          %207 = dma.hbm_to_vmem [thread:$0]  %s200, 1024, %s202, %s190, 128, 128, 8
        $region32: #{tpu_custom_call.1} parent=23 // pred_fallthru
          _
      $region24: #{tpu_custom_call.1} parent=5 // pred_fallthru
        _
      %p208 = scmp.le.s32.totalorder 1, %s19
      %p209 = scmp.lt.s32.totalorder %s19, 3
      %p210 = pnand %p208, %p209
      %p211 = pneg %p210
      // Predicated region
      $region33: #{tpu_custom_call.1} parent=5 // pred_check
        _
      $region34: #{tpu_custom_call.1} parent=5 // pred_check_branch
        %213 = sbr.rel (%p210) target = $region36
      $region35: #{tpu_custom_call.1} parent=5 // pred_region
        %s214 = ssub.s32 %s19, 1
        %s215 = sand.u32 %s32, 1
        %s216 = scalar_lea.sflag [#allocation3], %s215
        %s217 = sand.u32 %s32, 1
        %s218 = smul.addr %s217, 64
        %s219 = scalar_lea.vmem [#allocation2], %s218
        // Predicated region
        $region37: #{tpu_custom_call.1} parent=35 // pred_check
          %p220 = pneg %p45
        $region38: #{tpu_custom_call.1} parent=35 // pred_check_branch
          %222 = sbr.rel (%p220) target = $region40
        $region39: #{tpu_custom_call.1} parent=35 // pred_region
          %224 = dma.done %s216, 1024
        $region40: #{tpu_custom_call.1} parent=35 // pred_fallthru
          _
        %s225 = sand.u32 %s58, 1
        %s226 = scalar_lea.sflag [#allocation6], %s225
        %s227 = sand.u32 %s58, 1
        %s228 = smul.addr %s227, 64
        %s229 = scalar_lea.vmem [#allocation5], %s228
        // Predicated region
        $region41: #{tpu_custom_call.1} parent=35 // pred_check
          %p230 = pneg %p71
        $region42: #{tpu_custom_call.1} parent=35 // pred_check_branch
          %232 = sbr.rel (%p230) target = $region44
        $region43: #{tpu_custom_call.1} parent=35 // pred_region
          %234 = dma.done %s226, 1024
        $region44: #{tpu_custom_call.1} parent=35 // pred_fallthru
          _
        %s235 = sand.u32 %s32, 1
        %s236 = scalar_lea.sflag [#allocation3], %s235
        %s237 = sand.u32 %s32, 1
        %s238 = smul.addr %s237, 64
        %s239 = scalar_lea.vmem [#allocation2], %s238
        %p240 = pneg %p45
        %p241 = pneg %p42
        %s242 = sand.u32 %s58, 1
        %s243 = scalar_lea.sflag [#allocation6], %s242
        %s244 = sand.u32 %s58, 1
        %s245 = smul.addr %s244, 64
        %s246 = scalar_lea.vmem [#allocation5], %s245
        %p247 = pneg %p71
        %p248 = pneg %p68
        %p249 = pneg %p92
        %p250 = pneg %p89
        %p251 = pneg %p113
        %p252 = pneg %p110
        %p253 = pneg %p139
        %p254 = pneg %p136
        %s255 = sand.u32 %s126, 1
        %s256 = scalar_lea.sflag [#allocation4], %s255
        %s257 = sand.u32 %s126, 1
        %s258 = smul.addr %s257, 8
        %s259 = scalar_lea.vmem [#allocation7], %s258
        %s260 = smul.u32 8, %s24
        %s261 = smul.u32 8, %s24
        %v262 = vld [vmem:[%s219] sm:$0xff]
        %v263 = vld [vmem:[%s219 + $0x8] sm:$0xff]
        %v264 = vld [vmem:[%s219 + $0x10] sm:$0xff]
        %v265 = vld [vmem:[%s219 + $0x18] sm:$0xff]
        %v266 = vld [vmem:[%s219 + $0x20] sm:$0xff]
        %v267 = vld [vmem:[%s219 + $0x28] sm:$0xff]
        %v268 = vld [vmem:[%s219 + $0x30] sm:$0xff]
        %v269 = vld [vmem:[%s219 + $0x38] sm:$0xff]
        %v270 = vld [vmem:[%s229] sm:$0xff]
        %v271 = vld [vmem:[%s229 + $0x8] sm:$0xff]
        %v272 = vld [vmem:[%s229 + $0x10] sm:$0xff]
        %v273 = vld [vmem:[%s229 + $0x18] sm:$0xff]
        %v274 = vld [vmem:[%s229 + $0x20] sm:$0xff]
        %v275 = vld [vmem:[%s229 + $0x28] sm:$0xff]
        %v276 = vld [vmem:[%s229 + $0x30] sm:$0xff]
        %v277 = vld [vmem:[%s229 + $0x38] sm:$0xff]
        %v278 = vld [vmem:[%s2] sm:$0xff]
        %v279 = vld [vmem:[%s2 + $0x8] sm:$0xff]
        %v280 = vld [vmem:[%s2 + $0x10] sm:$0xff]
        %v281 = vld [vmem:[%s2 + $0x18] sm:$0xff]
        %v282 = vld [vmem:[%s2 + $0x20] sm:$0xff]
        %v283 = vld [vmem:[%s2 + $0x28] sm:$0xff]
        %v284 = vld [vmem:[%s2 + $0x30] sm:$0xff]
        %v285 = vld [vmem:[%s2 + $0x38] sm:$0xff]
        %vm286 = vcmask 523264
        %v288 = vsel %vm286, %v262, 0
        %v291 = vsel %vm286, %v263, 0
        %v294 = vsel %vm286, %v264, 0
        %v297 = vsel %vm286, %v265, 0
        %v300 = vsel %vm286, %v266, 0
        %v303 = vsel %vm286, %v267, 0
        %v306 = vsel %vm286, %v268, 0
        %v309 = vsel %vm286, %v269, 0
        %311 = vmatpush.msra.mxu0 0.0
        %312 = vmatpush.msra.mxu0 0.0
        %313 = vmatpush.msra.mxu0 0.0
        %314 = vmatpush.msra.mxu0 0.0
        %315 = vmatpush.msra.mxu0 0.0
        %316 = vmatpush.msra.mxu0 0.0
        %317 = vmatpush.msra.mxu0 0.0
        %318 = vmatpush.msra.mxu0 0.0
        %319 = vmatpush.msra.mxu0 %v285
        %320 = vmatpush.msra.mxu0 %v284
        %321 = vmatpush.msra.mxu0 %v283
        %322 = vmatpush.msra.mxu0 %v282
        %323 = vmatpush.msra.mxu0 %v281
        %324 = vmatpush.msra.mxu0 %v280
        %325 = vmatpush.msra.mxu0 %v279
        %326 = vmatpush.msra.mxu0 %v278
        %327 = vmatmul.f32.gmra.mxu0 %v288
        %v328 = vpop.f32.mrf.mxu0
        %v329 = vadd.f32 0.0, %v328
        %330 = vmatmul.f32.gmra.mxu0 %v291
        %v331 = vpop.f32.mrf.mxu0
        %v332 = vadd.f32 0.0, %v331
        %333 = vmatmul.f32.gmra.mxu0 %v294
        %v334 = vpop.f32.mrf.mxu0
        %v335 = vadd.f32 0.0, %v334
        %336 = vmatmul.f32.gmra.mxu0 %v297
        %v337 = vpop.f32.mrf.mxu0
        %v338 = vadd.f32 0.0, %v337
        %339 = vmatmul.f32.gmra.mxu0 %v300
        %v340 = vpop.f32.mrf.mxu0
        %v341 = vadd.f32 0.0, %v340
        %342 = vmatmul.f32.gmra.mxu0 %v303
        %v343 = vpop.f32.mrf.mxu0
        %v344 = vadd.f32 0.0, %v343
        %345 = vmatmul.f32.gmra.mxu0 %v306
        %v346 = vpop.f32.mrf.mxu0
        %v347 = vadd.f32 0.0, %v346
        %348 = vmatmul.f32.gmra.mxu0 %v309
        %v349 = vpop.f32.mrf.mxu0
        %v350 = vadd.f32 0.0, %v349
        %351 = vdwg.mxu0
        %v352 = vld [vmem:[%s3] sm:$0xff]
        %v353 = vld [vmem:[%s3 + $0x8] sm:$0xff]
        %vm354 = vcmask 130048
        %v356 = vsel %vm354, %v270, 0
        %v359 = vsel %vm354, %v271, 0
        %v362 = vsel %vm354, %v272, 0
        %v365 = vsel %vm354, %v273, 0
        %v368 = vsel %vm354, %v274, 0
        %v371 = vsel %vm354, %v275, 0
        %v374 = vsel %vm354, %v276, 0
        %v377 = vsel %vm354, %v277, 0
        %379 = vmatpush.msra.mxu0 0.0
        %380 = vmatpush.msra.mxu0 0.0
        %381 = vmatpush.msra.mxu0 0.0
        %382 = vmatpush.msra.mxu0 0.0
        %383 = vmatpush.msra.mxu0 0.0
        %384 = vmatpush.msra.mxu0 0.0
        %385 = vmatpush.msra.mxu0 0.0
        %386 = vmatpush.msra.mxu0 0.0
        %387 = vmatpush.msra.mxu0 0.0
        %388 = vmatpush.msra.mxu0 0.0
        %389 = vmatpush.msra.mxu0 0.0
        %390 = vmatpush.msra.mxu0 0.0
        %391 = vmatpush.msra.mxu0 0.0
        %392 = vmatpush.msra.mxu0 0.0
        %393 = vmatpush.msra.mxu0 %v353
        %394 = vmatpush.msra.mxu0 %v352
        %395 = vmatmul.f32.gmra.mxu0 %v356
        %v396 = vpop.f32.mrf.mxu0
        %v397 = vadd.f32 0.0, %v396
        %398 = vmatmul.f32.gmra.mxu0 %v359
        %v399 = vpop.f32.mrf.mxu0
        %v400 = vadd.f32 0.0, %v399
        %401 = vmatmul.f32.gmra.mxu0 %v362
        %v402 = vpop.f32.mrf.mxu0
        %v403 = vadd.f32 0.0, %v402
        %404 = vmatmul.f32.gmra.mxu0 %v365
        %v405 = vpop.f32.mrf.mxu0
        %v406 = vadd.f32 0.0, %v405
        %407 = vmatmul.f32.gmra.mxu0 %v368
        %v408 = vpop.f32.mrf.mxu0
        %v409 = vadd.f32 0.0, %v408
        %410 = vmatmul.f32.gmra.mxu0 %v371
        %v411 = vpop.f32.mrf.mxu0
        %v412 = vadd.f32 0.0, %v411
        %413 = vmatmul.f32.gmra.mxu0 %v374
        %v414 = vpop.f32.mrf.mxu0
        %v415 = vadd.f32 0.0, %v414
        %416 = vmatmul.f32.gmra.mxu0 %v377
        %v417 = vpop.f32.mrf.mxu0
        %v418 = vadd.f32 0.0, %v417
        %419 = vdwg.mxu0
        %v420 = vtanh.pop %v329
        %v421 = vtanh.pop %v332
        %v422 = vtanh.pop %v335
        %v423 = vtanh.pop %v338
        %v424 = vtanh.pop %v341
        %v425 = vtanh.pop %v344
        %v426 = vtanh.pop %v347
        %v427 = vtanh.pop %v350
        %v428 = vmul.f32 %v397, %v420
        %v429 = vmul.f32 %v400, %v421
        %v430 = vmul.f32 %v403, %v422
        %v431 = vmul.f32 %v406, %v423
        %v432 = vmul.f32 %v409, %v424
        %v433 = vmul.f32 %v412, %v425
        %v434 = vmul.f32 %v415, %v426
        %v435 = vmul.f32 %v418, %v427
        %vm436 = vcmask 261120
        %v437 = vsel %vm436, %v428, 0.0
        %438 = vadd.xlane.f32.xlu0 %v437
        %v439 = vpop.xlane.xlu0 %438
        %v440 = vsel %vm436, %v429, 0.0
        %441 = vadd.xlane.f32.xlu0 %v440
        %v442 = vpop.xlane.xlu0 %441
        %v443 = vsel %vm436, %v430, 0.0
        %444 = vadd.xlane.f32.xlu0 %v443
        %v445 = vpop.xlane.xlu0 %444
        %v446 = vsel %vm436, %v431, 0.0
        %447 = vadd.xlane.f32.xlu0 %v446
        %v448 = vpop.xlane.xlu0 %447
        %v449 = vsel %vm436, %v432, 0.0
        %450 = vadd.xlane.f32.xlu0 %v449
        %v451 = vpop.xlane.xlu0 %450
        %v452 = vsel %vm436, %v433, 0.0
        %453 = vadd.xlane.f32.xlu0 %v452
        %v454 = vpop.xlane.xlu0 %453
        %v455 = vsel %vm436, %v434, 0.0
        %456 = vadd.xlane.f32.xlu0 %v455
        %v457 = vpop.xlane.xlu0 %456
        %v458 = vsel %vm436, %v435, 0.0
        %459 = vadd.xlane.f32.xlu0 %v458
        %v460 = vpop.xlane.xlu0 %459
        %v469 = vlaneseq
        %v470 = vand.u32 %v469, 127
        %v471 = vperm.slane %v439, %v470
        %v472 = vperm.slane %v442, %v470
        %v473 = vperm.slane %v445, %v470
        %v474 = vperm.slane %v448, %v470
        %v475 = vperm.slane %v451, %v470
        %v476 = vperm.slane %v454, %v470
        %v477 = vperm.slane %v457, %v470
        %v478 = vperm.slane %v460, %v470
        %vm479 = vcmask 1041409
        %v480 = vsel %vm479, %v472, %v471
        %vm481 = vcmask 1042434
        %v482 = vsel %vm481, %v473, %v480
        %vm483 = vcmask 1043459
        %v484 = vsel %vm483, %v474, %v482
        %vm485 = vcmask 1044484
        %v486 = vsel %vm485, %v475, %v484
        %vm487 = vcmask 1045509
        %v488 = vsel %vm487, %v476, %v486
        %vm489 = vcmask 1046534
        %v490 = vsel %vm489, %v477, %v488
        %vm491 = vcmask 1047559
        %v492 = vsel %vm491, %v478, %v490
        %vm494 = vcmask 64512
        %v495 = vsel %vm494, %v492, -inf
        %496 = vmax.xlane.f32.xlu0 %v495
        %v497 = vpop.xlane.xlu0 %496
        %v499 = vperm.slane %v497, 0
        %v500 = vperm.slane %v497, 1
        %v501 = vperm.slane %v497, 2
        %v502 = vperm.slane %v497, 3
        %v503 = vperm.slane %v497, 4
        %v504 = vperm.slane %v497, 5
        %v505 = vperm.slane %v497, 6
        %v506 = vperm.slane %v497, 7
        %v515 = vsub.f32 %v439, %v499
        %v516 = vsub.f32 %v442, %v500
        %v517 = vsub.f32 %v445, %v501
        %v518 = vsub.f32 %v448, %v502
        %v519 = vsub.f32 %v451, %v503
        %v520 = vsub.f32 %v454, %v504
        %v521 = vsub.f32 %v457, %v505
        %v522 = vsub.f32 %v460, %v506
        %v523 = vmul.f32 %v515, 1.442695
        %v524 = vpow.pop %v523
        %v525 = vmul.f32 %v516, 1.442695
        %v526 = vpow.pop %v525
        %v527 = vmul.f32 %v517, 1.442695
        %v528 = vpow.pop %v527
        %v529 = vmul.f32 %v518, 1.442695
        %v530 = vpow.pop %v529
        %v531 = vmul.f32 %v519, 1.442695
        %v532 = vpow.pop %v531
        %v533 = vmul.f32 %v520, 1.442695
        %v534 = vpow.pop %v533
        %v535 = vmul.f32 %v521, 1.442695
        %v536 = vpow.pop %v535
        %v537 = vmul.f32 %v522, 1.442695
        %v538 = vpow.pop %v537
        %547 = vset.pattern.permute.xlu0 0
        %548 = vperm.xlu0 %547, %v524
        %v549 = vpop.permute.xlu0 %548
        %550 = vset.pattern.permute.xlu0 0
        %551 = vperm.xlu0 %550, %v526
        %v552 = vpop.permute.xlu0 %551
        %553 = vset.pattern.permute.xlu0 0
        %554 = vperm.xlu0 %553, %v528
        %v555 = vpop.permute.xlu0 %554
        %556 = vset.pattern.permute.xlu0 0
        %557 = vperm.xlu0 %556, %v530
        %v558 = vpop.permute.xlu0 %557
        %559 = vset.pattern.permute.xlu0 0
        %560 = vperm.xlu0 %559, %v532
        %v561 = vpop.permute.xlu0 %560
        %562 = vset.pattern.permute.xlu0 0
        %563 = vperm.xlu0 %562, %v534
        %v564 = vpop.permute.xlu0 %563
        %565 = vset.pattern.permute.xlu0 0
        %566 = vperm.xlu0 %565, %v536
        %v567 = vpop.permute.xlu0 %566
        %568 = vset.pattern.permute.xlu0 0
        %569 = vperm.xlu0 %568, %v538
        %v570 = vpop.permute.xlu0 %569
        %v571 = vperm.slane %v549, %v470
        %v572 = vperm.slane %v552, %v470
        %v573 = vperm.slane %v555, %v470
        %v574 = vperm.slane %v558, %v470
        %v575 = vperm.slane %v561, %v470
        %v576 = vperm.slane %v564, %v470
        %v577 = vperm.slane %v567, %v470
        %v578 = vperm.slane %v570, %v470
        %v579 = vsel %vm479, %v572, %v571
        %v580 = vsel %vm481, %v573, %v579
        %v581 = vsel %vm483, %v574, %v580
        %v582 = vsel %vm485, %v575, %v581
        %v583 = vsel %vm487, %v576, %v582
        %v584 = vsel %vm489, %v577, %v583
        %v585 = vsel %vm491, %v578, %v584
        %v587 = vsel %vm494, %v585, 0.0
        %588 = vadd.xlane.f32.xlu0 %v587
        %v589 = vpop.xlane.xlu0 %588
        %v590 = vrcp.pop %v589
        %v592 = vperm.slane %v590, 0
        %v593 = vperm.slane %v590, 1
        %v594 = vperm.slane %v590, 2
        %v595 = vperm.slane %v590, 3
        %v596 = vperm.slane %v590, 4
        %v597 = vperm.slane %v590, 5
        %v598 = vperm.slane %v590, 6
        %v599 = vperm.slane %v590, 7
        %v608 = vmul.f32 %v524, %v592
        %v609 = vmul.f32 %v526, %v593
        %v610 = vmul.f32 %v528, %v594
        %v611 = vmul.f32 %v530, %v595
        %v612 = vmul.f32 %v532, %v596
        %v613 = vmul.f32 %v534, %v597
        %v614 = vmul.f32 %v536, %v598
        %v615 = vmul.f32 %v538, %v599
        %617 = vset.pattern.permute.xlu0 0
        %618 = vperm.xlu0 %617, %v608
        %v619 = vpop.permute.xlu0 %618
        %622 = vset.pattern.permute.xlu0 0
        %623 = vperm.xlu0 %622, %v609
        %v624 = vpop.permute.xlu0 %623
        %627 = vset.pattern.permute.xlu0 0
        %628 = vperm.xlu0 %627, %v610
        %v629 = vpop.permute.xlu0 %628
        %632 = vset.pattern.permute.xlu0 0
        %633 = vperm.xlu0 %632, %v611
        %v634 = vpop.permute.xlu0 %633
        %637 = vset.pattern.permute.xlu0 0
        %638 = vperm.xlu0 %637, %v612
        %v639 = vpop.permute.xlu0 %638
        %642 = vset.pattern.permute.xlu0 0
        %643 = vperm.xlu0 %642, %v613
        %v644 = vpop.permute.xlu0 %643
        %647 = vset.pattern.permute.xlu0 0
        %648 = vperm.xlu0 %647, %v614
        %v649 = vpop.permute.xlu0 %648
        %652 = vset.pattern.permute.xlu0 0
        %653 = vperm.xlu0 %652, %v615
        %v654 = vpop.permute.xlu0 %653
        %v656 = vmul.f32 %v619, %v262
        %v657 = vmul.f32 %v624, %v263
        %v658 = vmul.f32 %v629, %v264
        %v659 = vmul.f32 %v634, %v265
        %v660 = vmul.f32 %v639, %v266
        %v661 = vmul.f32 %v644, %v267
        %v662 = vmul.f32 %v649, %v268
        %v663 = vmul.f32 %v654, %v269
        %v664 = vsel %vm286, %v656, 0.0
        %v665 = vrot.slane %v664, 4
        %v666 = vadd.f32 %v664, %v665
        %v667 = vrot.slane %v666, 2
        %v668 = vadd.f32 %v666, %v667
        %v669 = vrot.slane %v668, 1
        %v670 = vadd.f32 %v668, %v669
        %v671 = vsel %vm286, %v657, 0.0
        %v672 = vrot.slane %v671, 4
        %v673 = vadd.f32 %v671, %v672
        %v674 = vrot.slane %v673, 2
        %v675 = vadd.f32 %v673, %v674
        %v676 = vrot.slane %v675, 1
        %v677 = vadd.f32 %v675, %v676
        %v678 = vsel %vm286, %v658, 0.0
        %v679 = vrot.slane %v678, 4
        %v680 = vadd.f32 %v678, %v679
        %v681 = vrot.slane %v680, 2
        %v682 = vadd.f32 %v680, %v681
        %v683 = vrot.slane %v682, 1
        %v684 = vadd.f32 %v682, %v683
        %v685 = vsel %vm286, %v659, 0.0
        %v686 = vrot.slane %v685, 4
        %v687 = vadd.f32 %v685, %v686
        %v688 = vrot.slane %v687, 2
        %v689 = vadd.f32 %v687, %v688
        %v690 = vrot.slane %v689, 1
        %v691 = vadd.f32 %v689, %v690
        %v692 = vsel %vm286, %v660, 0.0
        %v693 = vrot.slane %v692, 4
        %v694 = vadd.f32 %v692, %v693
        %v695 = vrot.slane %v694, 2
        %v696 = vadd.f32 %v694, %v695
        %v697 = vrot.slane %v696, 1
        %v698 = vadd.f32 %v696, %v697
        %v699 = vsel %vm286, %v661, 0.0
        %v700 = vrot.slane %v699, 4
        %v701 = vadd.f32 %v699, %v700
        %v702 = vrot.slane %v701, 2
        %v703 = vadd.f32 %v701, %v702
        %v704 = vrot.slane %v703, 1
        %v705 = vadd.f32 %v703, %v704
        %v706 = vsel %vm286, %v662, 0.0
        %v707 = vrot.slane %v706, 4
        %v708 = vadd.f32 %v706, %v707
        %v709 = vrot.slane %v708, 2
        %v710 = vadd.f32 %v708, %v709
        %v711 = vrot.slane %v710, 1
        %v712 = vadd.f32 %v710, %v711
        %v713 = vsel %vm286, %v663, 0.0
        %v714 = vrot.slane %v713, 4
        %v715 = vadd.f32 %v713, %v714
        %v716 = vrot.slane %v715, 2
        %v717 = vadd.f32 %v715, %v716
        %v718 = vrot.slane %v717, 1
        %v719 = vadd.f32 %v717, %v718
        %v728 = vsel %vm479, %v677, %v670
        %v729 = vsel %vm481, %v684, %v728
        %v730 = vsel %vm483, %v691, %v729
        %v731 = vsel %vm485, %v698, %v730
        %v732 = vsel %vm487, %v705, %v731
        %v733 = vsel %vm489, %v712, %v732
        %v734 = vsel %vm491, %v719, %v733
        %736 = vst.msk [vmem:[%s259] sm:$0xff] %vm286, %v734
        %s737 = sand.u32 %s126, 1
        %s738 = scalar_lea.sflag [#allocation4], %s737
        %s739 = sand.u32 %s126, 1
        %s740 = smul.addr %s739, 8
        %s741 = scalar_lea.vmem [#allocation7], %s740
        // Predicated region
        $region45: #{tpu_custom_call.1} parent=35 // pred_check
          %p742 = pneg %p136
        $region46: #{tpu_custom_call.1} parent=35 // pred_check_branch
          %744 = sbr.rel (%p742) target = $region48
        $region47: #{tpu_custom_call.1} parent=35 // pred_region
          %746 = vsyncadd %s738, 0
          %s747 = smul.addr %s24, 8
          %s748 = scalar_lea.hbm %s4, %s747
          %s750 = sshll.u32 %s741, 4
          %s751 = int_to_ptr.vmem [resolvable:$true] %s750
          %s752 = sshll.u32 %s748, 4
          %s753 = int_to_ptr.hbm [resolvable:$true] %s752
          %755 = dma.vmem_to_hbm [thread:$0]  %s751, 128, %s753, %s738
        $region48: #{tpu_custom_call.1} parent=35 // pred_fallthru
          _
      $region36: #{tpu_custom_call.1} parent=5 // pred_fallthru
        _
      %p756 = scmp.le.s32.totalorder 2, %s19
      // Predicated region
      $region49: #{tpu_custom_call.1} parent=5 // pred_check
        %p757 = pneg %p756
      $region50: #{tpu_custom_call.1} parent=5 // pred_check_branch
        %759 = sbr.rel (%p757) target = $region52
      $region51: #{tpu_custom_call.1} parent=5 // pred_region
        %s760 = ssub.s32 %s19, 2
        // Predicated region
        $region53: #{tpu_custom_call.1} parent=51 // pred_check
          %p761 = pneg %p142
        $region54: #{tpu_custom_call.1} parent=51 // pred_check_branch
          %763 = sbr.rel (%p761) target = $region56
        $region55: #{tpu_custom_call.1} parent=51 // pred_region
          %s764 = sand.u32 %s127, 1
          %s765 = scalar_lea.sflag [#allocation4], %s764
          %s766 = sand.u32 %s127, 1
          %s767 = smul.addr %s766, 8
          %s768 = scalar_lea.vmem [#allocation7], %s767
          %770 = dma.done %s765, 128
        $region56: #{tpu_custom_call.1} parent=51 // pred_fallthru
          _
      $region52: #{tpu_custom_call.1} parent=5 // pred_fallthru
        _
    $region6: #{tpu_custom_call.1} parent=1 // loop_footer
      %s23 = sadd.s32 1, %s19
    $region7: #{tpu_custom_call.1} parent=1 // loop_footer_branch
      %18 = sbr.rel target = $region3
    $region8: #{tpu_custom_call.1} parent=1 // loop_exit
      _
    %771 = vsyncpa [#allocation3], 1
    %s772 = scalar_lea.sflag [#allocation3], 1
    %773 = vsyncpa %s772, 1
    %774 = vsyncpa [#allocation6], 1
    %s775 = scalar_lea.sflag [#allocation6], 1
    %776 = vsyncpa %s775, 1
    %777 = vsyncpa [#allocation4], 1
    %s778 = scalar_lea.sflag [#allocation4], 1
    %779 = vsyncpa %s778, 1

</llo_original>
